<compile_context>
chip_gen: v6e
topology: v6e:2x2x1
jax: 0.10.0
libtpu: 0.0.40
codegen_flags: <defaults>
</compile_context>

<pallas_src>
import functools

import jax
import jax.numpy as jnp
from jax.experimental import pallas as pl
from jax.experimental.pallas import tpu as pltpu

_CPAD = 8  # f32 sublane multiple


def _ode_block_kernel(x_ref, w_ref, b_ref, m_ref, o_ref, *, W, tot, num_steps):
    # x_ref: (C_pad, L)        f32  ODE state, lane = sample*H*W + row*W + col
    # w_ref: (C_pad, 9*C_pad)  f32  dt-scaled conv weights, col = tap*C_pad + ci
    # b_ref: (C_pad, 1)        f32  dt-scaled bias
    # m_ref: (9*C_pad, L)      f32  0/1 tap-validity mask (conv zero padding)
    # o_ref: (C_pad, L)        f32  integrated state at t = 1
    w_dt = w_ref[...]
    b_dt = b_ref[...]
    mask = m_ref[...]

    def euler_body(_, xn):
        # 8 non-center taps via lane rotation on the XLU; wrap-around and
        # cross-row / cross-sample bleed is killed by the 0/1 mask below.
        taps = []
        for kh in range(3):
            for kw in range(3):
                s = (kh - 1) * W + (kw - 1)
                taps.append(xn if s == 0
                            else pltpu.roll(xn, shift=(-s) % tot, axis=1))
        patches = jnp.concatenate(taps, axis=0) * mask      # (9*C_pad, L)
        f = jnp.dot(w_dt, patches,
                    preferred_element_type=jnp.float32) + b_dt
        return xn + f                                       # dt folded into w,b

    out = jax.lax.fori_loop(0, num_steps, euler_body, x_ref[...], unroll=True)
    o_ref[...] = out.astype(o_ref.dtype)


def ode_block(x_nchw, w_oihw, bias, *, num_steps=4, batch_block=1):
    """odeint(conv3x3 + bias, x, [0, 1]) via fixed-step Euler; NCHW in/out."""
    N, C, H, W = x_nchw.shape
    assert w_oihw.shape == (C, C, 3, 3), "ODE state must keep its shape"
    assert C <= _CPAD
    assert N % batch_block == 0
    NB = batch_block
    NBLK = N // NB
    HW = H * W
    L = NB * HW                      # lanes per grid step
    dt = 1.0 / num_steps

    # State layout: (NBLK, C_pad, NB*HW); channels zero-padded to 8 sublanes.
    x = x_nchw.reshape(NBLK, NB, C, HW).transpose(0, 2, 1, 3).reshape(NBLK, C, L)
    x = jnp.pad(x.astype(jnp.float32), ((0, 0), (0, _CPAD - C), (0, 0)))

    # Weights OIHW -> (C_pad, (kh*3+kw)*C_pad + ci), pre-scaled by dt, f32.
    w = jnp.transpose(w_oihw, (2, 3, 0, 1)).astype(jnp.float32)      # (3,3,O,I)
    w = jnp.pad(w, ((0, 0), (0, 0), (0, _CPAD - C), (0, _CPAD - C)))
    w2d = (dt * w).transpose(2, 0, 1, 3).reshape(_CPAD, 9 * _CPAD)
    b_dt = (dt * jnp.pad(bias.astype(jnp.float32),
                         (0, _CPAD - C))).reshape(_CPAD, 1)

    # 0/1 validity mask per (tap, lane): implements the conv's zero padding and
    # kills pltpu.roll wrap-around across rows / samples.  Loop-invariant.
    q = jnp.arange(L, dtype=jnp.int32) % HW
    r, c = q // W, q % W
    tap_masks = []
    for kh in range(3):
        for kw in range(3):
            rr, cc = r + (kh - 1), c + (kw - 1)
            m = (rr >= 0) & (rr < H) & (cc >= 0) & (cc < W)
            tap_masks.append(jnp.broadcast_to(m[None, :], (_CPAD, L)))
    mask = jnp.concatenate(tap_masks, axis=0).astype(jnp.float32)    # (72, L)

    out = pl.pallas_call(
        functools.partial(_ode_block_kernel, W=W, tot=L, num_steps=num_steps),
        out_shape=jax.ShapeDtypeStruct((NBLK, _CPAD, L), jnp.float32),
        grid_spec=pltpu.PrefetchScalarGridSpec(
            num_scalar_prefetch=0,
            grid=(NBLK,),
            in_specs=[
                pl.BlockSpec((None, _CPAD, L), lambda b: (b, 0, 0)),
                pl.BlockSpec((_CPAD, 9 * _CPAD), lambda b: (0, 0)),
                pl.BlockSpec((_CPAD, 1), lambda b: (0, 0)),
                pl.BlockSpec((9 * _CPAD, L), lambda b: (0, 0)),
            ],
            out_specs=pl.BlockSpec((None, _CPAD, L), lambda b: (b, 0, 0)),
        ),
        compiler_params=pltpu.CompilerParams(
            dimension_semantics=("parallel",)),
    )(x, w2d, b_dt, mask)

    # (NBLK, C_pad, NB*HW) -> NCHW, drop channel padding.
    out = out.reshape(NBLK, _CPAD, NB, HW).transpose(0, 2, 1, 3)
    return out.reshape(N, _CPAD, H, W)[:, :C]


def _reference(x_nchw, w_oihw, bias, *, num_steps=4):
    # Pure-JAX fixed-step Euler reference (PyTorch conv semantics, NCHW, f32).
    dt = 1.0 / num_steps
    x = x_nchw
    for _ in range(num_steps):
        f = jax.lax.conv_general_dilated(
            x, w_oihw, window_strides=(1, 1), padding="SAME",
            dimension_numbers=("NCHW", "OIHW", "NCHW"),
            precision=jax.lax.Precision.HIGHEST)
        x = x + dt * (f + bias.reshape(1, -1, 1, 1))
    return x


if __name__ == "__main__":
    key = jax.random.PRNGKey(0)
    k_x, k_w, k_b = jax.random.split(key, 3)

    N, C, H, W = 2, 4, 16, 16
    x = jax.random.normal(k_x, (N, C, H, W), dtype=jnp.float32)
    # Deterministic synthetic odefunc parameters: Conv2d(C, C, 3, padding=1).
    w = jax.random.normal(k_w, (C, C, 3, 3), dtype=jnp.float32) * 0.1
    b = jax.random.normal(k_b, (C,), dtype=jnp.float32) * 0.1

    out = jax.block_until_ready(ode_block(x, w, b))
    ref = _reference(x, w, b)

    assert out.shape == (N, C, H, W)
    assert jnp.allclose(out, ref, atol=3e-2, rtol=3e-2), "mismatch vs reference"

    print("KERNEL_OK")
</pallas_src>

<mosaic_0001>
module attributes {stable_mosaic.version = 11 : i64} {
  func.func @_ode_block_kernel(%arg0: i32, %arg1: memref<1x8x256xf32, #tpu.memory_space<vmem>>, %arg2: memref<8x72xf32, #tpu.memory_space<vmem>>, %arg3: memref<8x1xf32, #tpu.memory_space<vmem>>, %arg4: memref<72x256xf32, #tpu.memory_space<vmem>>, %arg5: memref<1x8x256xf32, #tpu.memory_space<vmem>>) attributes {dimension_semantics = [#tpu.dimension_semantics<parallel>], iteration_bounds = array<i64: 2>, scalar_prefetch = 0 : i64, scratch_operands = 0 : i64, tpu.core_type = #tpu.core_type<tc>, window_params = [{transform_indices = @transform_0, window_bounds = array<i64: 1, 8, 256>}, {pipeline_mode = #tpu.pipeline_mode<synchronous>, transform_indices = @transform_1, window_bounds = array<i64: 8, 72>}, {pipeline_mode = #tpu.pipeline_mode<synchronous>, transform_indices = @transform_2, window_bounds = array<i64: 8, 1>}, {pipeline_mode = #tpu.pipeline_mode<synchronous>, transform_indices = @transform_3, window_bounds = array<i64: 72, 256>}, {transform_indices = @transform_4, window_bounds = array<i64: 1, 8, 256>}]} {
    %c0 = arith.constant 0 : index
    %c0_0 = arith.constant 0 : index
    %0 = vector.load %arg2[%c0, %c0_0] : memref<8x72xf32, #tpu.memory_space<vmem>>, vector<8x72xf32>
    %c0_1 = arith.constant 0 : index
    %c0_2 = arith.constant 0 : index
    %1 = vector.load %arg3[%c0_1, %c0_2] : memref<8x1xf32, #tpu.memory_space<vmem>>, vector<8x1xf32>
    %c0_3 = arith.constant 0 : index
    %c0_4 = arith.constant 0 : index
    %2 = vector.load %arg4[%c0_3, %c0_4] : memref<72x256xf32, #tpu.memory_space<vmem>>, vector<72x256xf32>
    %c0_5 = arith.constant 0 : index
    %c0_6 = arith.constant 0 : index
    %c0_7 = arith.constant 0 : index
    %3 = vector.load %arg1[%c0_5, %c0_6, %c0_7] : memref<1x8x256xf32, #tpu.memory_space<vmem>>, vector<1x8x256xf32>
    %4 = vector.shape_cast %3 : vector<1x8x256xf32> to vector<8x256xf32>
    %c0_i32 = arith.constant 0 : i32
    %c17_i32 = arith.constant 17 : i32
    %5 = tpu.dynamic_rotate %4 by %c17_i32 dim 1 : vector<8x256xf32>, i32 -> vector<8x256xf32>
    %c16_i32 = arith.constant 16 : i32
    %6 = tpu.dynamic_rotate %4 by %c16_i32 dim 1 : vector<8x256xf32>, i32 -> vector<8x256xf32>
    %c15_i32 = arith.constant 15 : i32
    %7 = tpu.dynamic_rotate %4 by %c15_i32 dim 1 : vector<8x256xf32>, i32 -> vector<8x256xf32>
    %c1_i32 = arith.constant 1 : i32
    %8 = tpu.dynamic_rotate %4 by %c1_i32 dim 1 : vector<8x256xf32>, i32 -> vector<8x256xf32>
    %c255_i32 = arith.constant 255 : i32
    %9 = tpu.dynamic_rotate %4 by %c255_i32 dim 1 : vector<8x256xf32>, i32 -> vector<8x256xf32>
    %c241_i32 = arith.constant 241 : i32
    %10 = tpu.dynamic_rotate %4 by %c241_i32 dim 1 : vector<8x256xf32>, i32 -> vector<8x256xf32>
    %c240_i32 = arith.constant 240 : i32
    %11 = tpu.dynamic_rotate %4 by %c240_i32 dim 1 : vector<8x256xf32>, i32 -> vector<8x256xf32>
    %c239_i32 = arith.constant 239 : i32
    %12 = tpu.dynamic_rotate %4 by %c239_i32 dim 1 : vector<8x256xf32>, i32 -> vector<8x256xf32>
    %13 = tpu.concatenate %5, %6, %7, %8, %4, %9, %10, %11, %12 in 0 : vector<8x256xf32>, vector<8x256xf32>, vector<8x256xf32>, vector<8x256xf32>, vector<8x256xf32>, vector<8x256xf32>, vector<8x256xf32>, vector<8x256xf32>, vector<8x256xf32> -> vector<72x256xf32>
    %14 = arith.mulf %13, %2 : vector<72x256xf32>
    %cst = arith.constant dense<0.000000e+00> : vector<8x256xf32>
    %15 = tpu.matmul %0, %14, %cst {dimension_numbers = #tpu.dot_dimension_numbers<[1], [0], [0], [1], [0, 0, 1, 1], [], []>} : vector<8x72xf32>, vector<72x256xf32>, vector<8x256xf32> -> vector<8x256xf32>
    %16 = vector.broadcast %1 : vector<8x1xf32> to vector<8x256xf32>
    %17 = arith.addf %15, %16 : vector<8x256xf32>
    %18 = arith.addf %4, %17 : vector<8x256xf32>
    %c1_i32_8 = arith.constant 1 : i32
    %c17_i32_9 = arith.constant 17 : i32
    %19 = tpu.dynamic_rotate %18 by %c17_i32_9 dim 1 : vector<8x256xf32>, i32 -> vector<8x256xf32>
    %c16_i32_10 = arith.constant 16 : i32
    %20 = tpu.dynamic_rotate %18 by %c16_i32_10 dim 1 : vector<8x256xf32>, i32 -> vector<8x256xf32>
    %c15_i32_11 = arith.constant 15 : i32
    %21 = tpu.dynamic_rotate %18 by %c15_i32_11 dim 1 : vector<8x256xf32>, i32 -> vector<8x256xf32>
    %c1_i32_12 = arith.constant 1 : i32
    %22 = tpu.dynamic_rotate %18 by %c1_i32_12 dim 1 : vector<8x256xf32>, i32 -> vector<8x256xf32>
    %c255_i32_13 = arith.constant 255 : i32
    %23 = tpu.dynamic_rotate %18 by %c255_i32_13 dim 1 : vector<8x256xf32>, i32 -> vector<8x256xf32>
    %c241_i32_14 = arith.constant 241 : i32
    %24 = tpu.dynamic_rotate %18 by %c241_i32_14 dim 1 : vector<8x256xf32>, i32 -> vector<8x256xf32>
    %c240_i32_15 = arith.constant 240 : i32
    %25 = tpu.dynamic_rotate %18 by %c240_i32_15 dim 1 : vector<8x256xf32>, i32 -> vector<8x256xf32>
    %c239_i32_16 = arith.constant 239 : i32
    %26 = tpu.dynamic_rotate %18 by %c239_i32_16 dim 1 : vector<8x256xf32>, i32 -> vector<8x256xf32>
    %27 = tpu.concatenate %19, %20, %21, %22, %18, %23, %24, %25, %26 in 0 : vector<8x256xf32>, vector<8x256xf32>, vector<8x256xf32>, vector<8x256xf32>, vector<8x256xf32>, vector<8x256xf32>, vector<8x256xf32>, vector<8x256xf32>, vector<8x256xf32> -> vector<72x256xf32>
    %28 = arith.mulf %27, %2 : vector<72x256xf32>
    %cst_17 = arith.constant dense<0.000000e+00> : vector<8x256xf32>
    %29 = tpu.matmul %0, %28, %cst_17 {dimension_numbers = #tpu.dot_dimension_numbers<[1], [0], [0], [1], [0, 0, 1, 1], [], []>} : vector<8x72xf32>, vector<72x256xf32>, vector<8x256xf32> -> vector<8x256xf32>
    %30 = vector.broadcast %1 : vector<8x1xf32> to vector<8x256xf32>
    %31 = arith.addf %29, %30 : vector<8x256xf32>
    %32 = arith.addf %18, %31 : vector<8x256xf32>
    %c2_i32 = arith.constant 2 : i32
    %c17_i32_18 = arith.constant 17 : i32
    %33 = tpu.dynamic_rotate %32 by %c17_i32_18 dim 1 : vector<8x256xf32>, i32 -> vector<8x256xf32>
    %c16_i32_19 = arith.constant 16 : i32
    %34 = tpu.dynamic_rotate %32 by %c16_i32_19 dim 1 : vector<8x256xf32>, i32 -> vector<8x256xf32>
    %c15_i32_20 = arith.constant 15 : i32
    %35 = tpu.dynamic_rotate %32 by %c15_i32_20 dim 1 : vector<8x256xf32>, i32 -> vector<8x256xf32>
    %c1_i32_21 = arith.constant 1 : i32
    %36 = tpu.dynamic_rotate %32 by %c1_i32_21 dim 1 : vector<8x256xf32>, i32 -> vector<8x256xf32>
    %c255_i32_22 = arith.constant 255 : i32
    %37 = tpu.dynamic_rotate %32 by %c255_i32_22 dim 1 : vector<8x256xf32>, i32 -> vector<8x256xf32>
    %c241_i32_23 = arith.constant 241 : i32
    %38 = tpu.dynamic_rotate %32 by %c241_i32_23 dim 1 : vector<8x256xf32>, i32 -> vector<8x256xf32>
    %c240_i32_24 = arith.constant 240 : i32
    %39 = tpu.dynamic_rotate %32 by %c240_i32_24 dim 1 : vector<8x256xf32>, i32 -> vector<8x256xf32>
    %c239_i32_25 = arith.constant 239 : i32
    %40 = tpu.dynamic_rotate %32 by %c239_i32_25 dim 1 : vector<8x256xf32>, i32 -> vector<8x256xf32>
    %41 = tpu.concatenate %33, %34, %35, %36, %32, %37, %38, %39, %40 in 0 : vector<8x256xf32>, vector<8x256xf32>, vector<8x256xf32>, vector<8x256xf32>, vector<8x256xf32>, vector<8x256xf32>, vector<8x256xf32>, vector<8x256xf32>, vector<8x256xf32> -> vector<72x256xf32>
    %42 = arith.mulf %41, %2 : vector<72x256xf32>
    %cst_26 = arith.constant dense<0.000000e+00> : vector<8x256xf32>
    %43 = tpu.matmul %0, %42, %cst_26 {dimension_numbers = #tpu.dot_dimension_numbers<[1], [0], [0], [1], [0, 0, 1, 1], [], []>} : vector<8x72xf32>, vector<72x256xf32>, vector<8x256xf32> -> vector<8x256xf32>
    %44 = vector.broadcast %1 : vector<8x1xf32> to vector<8x256xf32>
    %45 = arith.addf %43, %44 : vector<8x256xf32>
    %46 = arith.addf %32, %45 : vector<8x256xf32>
    %c3_i32 = arith.constant 3 : i32
    %c17_i32_27 = arith.constant 17 : i32
    %47 = tpu.dynamic_rotate %46 by %c17_i32_27 dim 1 : vector<8x256xf32>, i32 -> vector<8x256xf32>
    %c16_i32_28 = arith.constant 16 : i32
    %48 = tpu.dynamic_rotate %46 by %c16_i32_28 dim 1 : vector<8x256xf32>, i32 -> vector<8x256xf32>
    %c15_i32_29 = arith.constant 15 : i32
    %49 = tpu.dynamic_rotate %46 by %c15_i32_29 dim 1 : vector<8x256xf32>, i32 -> vector<8x256xf32>
    %c1_i32_30 = arith.constant 1 : i32
    %50 = tpu.dynamic_rotate %46 by %c1_i32_30 dim 1 : vector<8x256xf32>, i32 -> vector<8x256xf32>
    %c255_i32_31 = arith.constant 255 : i32
    %51 = tpu.dynamic_rotate %46 by %c255_i32_31 dim 1 : vector<8x256xf32>, i32 -> vector<8x256xf32>
    %c241_i32_32 = arith.constant 241 : i32
    %52 = tpu.dynamic_rotate %46 by %c241_i32_32 dim 1 : vector<8x256xf32>, i32 -> vector<8x256xf32>
    %c240_i32_33 = arith.constant 240 : i32
    %53 = tpu.dynamic_rotate %46 by %c240_i32_33 dim 1 : vector<8x256xf32>, i32 -> vector<8x256xf32>
    %c239_i32_34 = arith.constant 239 : i32
    %54 = tpu.dynamic_rotate %46 by %c239_i32_34 dim 1 : vector<8x256xf32>, i32 -> vector<8x256xf32>
    %55 = tpu.concatenate %47, %48, %49, %50, %46, %51, %52, %53, %54 in 0 : vector<8x256xf32>, vector<8x256xf32>, vector<8x256xf32>, vector<8x256xf32>, vector<8x256xf32>, vector<8x256xf32>, vector<8x256xf32>, vector<8x256xf32>, vector<8x256xf32> -> vector<72x256xf32>
    %56 = arith.mulf %55, %2 : vector<72x256xf32>
    %cst_35 = arith.constant dense<0.000000e+00> : vector<8x256xf32>
    %57 = tpu.matmul %0, %56, %cst_35 {dimension_numbers = #tpu.dot_dimension_numbers<[1], [0], [0], [1], [0, 0, 1, 1], [], []>} : vector<8x72xf32>, vector<72x256xf32>, vector<8x256xf32> -> vector<8x256xf32>
    %58 = vector.broadcast %1 : vector<8x1xf32> to vector<8x256xf32>
    %59 = arith.addf %57, %58 : vector<8x256xf32>
    %60 = arith.addf %46, %59 : vector<8x256xf32>
    %c0_36 = arith.constant 0 : index
    %c0_37 = arith.constant 0 : index
    %c0_38 = arith.constant 0 : index
    %61 = vector.load %arg5[%c0_36, %c0_37, %c0_38] : memref<1x8x256xf32, #tpu.memory_space<vmem>>, vector<1x8x256xf32>
    %62 = vector.shape_cast %61 : vector<1x8x256xf32> to vector<8x256xf32>
    %63 = vector.shape_cast %60 : vector<8x256xf32> to vector<1x8x256xf32>
    tpu.vector_store %arg5[%c0_36, %c0_37, %c0_38], %63 {strides = array<i32>} : memref<1x8x256xf32, #tpu.memory_space<vmem>>, vector<1x8x256xf32>,
    return
  }
  func.func @transform_0(%arg0: i32) -> (i32, i32, i32) {
    %c0_i32 = arith.constant 0 : i32
    %c0_i32_0 = arith.constant 0 : i32
    %c0_i32_1 = arith.constant 0 : i32
    return %arg0, %c0_i32, %c0_i32_0 : i32, i32, i32
  }
  func.func @transform_1(%arg0: i32) -> (i32, i32) {
    %c0_i32 = arith.constant 0 : i32
    %c0_i32_0 = arith.constant 0 : i32
    %c0_i32_1 = arith.constant 0 : i32
    return %c0_i32, %c0_i32_0 : i32, i32
  }
  func.func @transform_2(%arg0: i32) -> (i32, i32) {
    %c0_i32 = arith.constant 0 : i32
    %c0_i32_0 = arith.constant 0 : i32
    %c0_i32_1 = arith.constant 0 : i32
    return %c0_i32, %c0_i32_0 : i32, i32
  }
  func.func @transform_3(%arg0: i32) -> (i32, i32) {
    %c0_i32 = arith.constant 0 : i32
    %c0_i32_0 = arith.constant 0 : i32
    %c0_i32_1 = arith.constant 0 : i32
    return %c0_i32, %c0_i32_0 : i32, i32
  }
  func.func @transform_4(%arg0: i32) -> (i32, i32, i32) {
    %c0_i32 = arith.constant 0 : i32
    %c0_i32_0 = arith.constant 0 : i32
    %c0_i32_1 = arith.constant 0 : i32
    return %arg0, %c0_i32, %c0_i32_0 : i32, i32, i32
  }
}

</mosaic_0001>

<llo_original>
// kernel: tpu_custom_call.1
$region0: #{tpu_custom_call.1}
  #allocation0 [shape = 'u32[]', space=smem, size = 0x4, offset = 0x4, fixed_abs, tag = 'smem constant byte address 0x4 - core index']
  #allocation1 [shape = 'u32[144,128]{1,0:T(1,128)}', space=vmem, size = 0x12000, scoped, tag = 'internal scratch']
  %s0 = inlined_call_operand.hbm [shape: f32[2,8,256], index: 0, kind: input, shape index: {}]
  %s1 = inlined_call_operand.vmem [shape: f32[8,72], index: 1, kind: input, shape index: {}]
  %s2 = inlined_call_operand.vmem [shape: f32[8,1], index: 2, kind: input, shape index: {}]
  %s3 = inlined_call_operand.hbm [shape: f32[72,256], index: 3, kind: input, shape index: {}]
  %s4 = inlined_call_operand.hbm [shape: f32[2,8,256], index: 4, kind: output, shape index: {}]
  %s5 = sld [smem:[#allocation0]]
  $region57: #{tpu_custom_call.1} parent=0
    _
  %s7 = ssub.s32 1, %s5
  %s8 = scalar_select 0, %s7, %s5
  $region1: #{tpu_custom_call.1} parent=0
    #allocation2 [shape = 'u8[16384]{0}', space=vmem, size = 0x4000, scoped, tag = 'input window, operand 0']
    #allocation3 [shape = 's32[2]{0}', space=sflag, size = 0x8, scoped, tag = 'scoped memory for tpu_custom_call.1']
    #allocation4 [shape = 's32[2]{0}', space=sflag, size = 0x8, scoped, tag = 'scoped memory for tpu_custom_call.1']
    #allocation5 [shape = 'u8[73728]{0}', space=vmem, size = 0x12000, scoped, tag = 'input window, operand 3, single buffered']
    #allocation6 [shape = 's32[1]{0}', space=sflag, size = 0x4, scoped, tag = 'scoped memory for tpu_custom_call.1']
    #allocation7 [shape = 'u8[16384]{0}', space=vmem, size = 0x4000, scoped, tag = 'output window, operand 0']
    %9 = vsyncpa [#allocation3], 0
    %s10 = scalar_lea.sflag [#allocation3], 1
    %11 = vsyncpa %s10, 0
    %12 = vsyncpa [#allocation6], 0
    %13 = vsyncpa [#allocation4], 0
    %s14 = scalar_lea.sflag [#allocation4], 1
    %15 = vsyncpa %s14, 0
    loop: start=0, step=1, limit=4
    $region2: #{tpu_custom_call.1} parent=1 // loop_pre_header
      _
    $region3: #{tpu_custom_call.1} parent=1 // loop_header
      %s17 = sphi 0, %s21
      %p18 = scmp.ge.s32.totalorder %s17, 4
      %s27 = sphi 0, %s29
      %s30 = sphi 0, %s27
      %s31 = sphi 0, %s30
      %s47 = sphi 0, %s31
      %s51 = sphi 0, %s51
      %s53 = sphi 0, %s51
      %s54 = sphi 0, %s53
      %s68 = sphi 0, %s54
      %s72 = sphi 0, %s72
      %s74 = sphi 0, %s72
      %s75 = sphi 0, %s74
      %s89 = sphi 0, %s75
      %s93 = sphi 0, %s93
      %s95 = sphi 0, %s93
      %s96 = sphi 0, %s95
      %s110 = sphi 0, %s96
      %s116 = sphi 0, %s118
      %s119 = sphi 0, %s116
      %s120 = sphi 0, %s119
      %s136 = sphi 0, %s120
    $region4: #{tpu_custom_call.1} parent=1 // loop_header_branch
      %20 = sbr.rel (%p18) target = $region8
    $region5: #{tpu_custom_call.1} parent=1 // loop_body
      %s22 = ssub.s32 %s17, 1
      %s23 = ssub.s32 %s17, 2
      %s24 = sadd.s32 %s17, 1
      %s25 = ssub.s32 %s17, %s24
      %p26 = scmp.eq.s32.totalorder %s25, 0
      %s28 = sadd.s32 %s27, 1
      %s29 = scalar_select %p26, %s27, %s28
      %p32 = pneg %p26
      %p33 = scmp.eq.s32.totalorder %s17, 1
      %p34 = por %p32, %p33
      %p35 = scmp.ne.s32.totalorder %s27, %s30
      %p36 = scmp.eq.s32.totalorder %s17, 0
      %p37 = por %p35, %p36
      %p38 = scmp.ne.s32.totalorder %s27, %s30
      %p39 = scmp.eq.s32.totalorder %s22, 1
      %p40 = por %p38, %p39
      %p41 = scmp.ne.s32.totalorder %s30, %s31
      %p42 = scmp.eq.s32.totalorder %s22, 0
      %p43 = por %p41, %p42
      %p44 = scmp.ne.s32.totalorder %s30, %s31
      %p45 = scmp.eq.s32.totalorder %s23, 1
      %p46 = por %p44, %p45
      %p48 = scmp.ne.s32.totalorder %s31, %s47
      %p49 = scmp.eq.s32.totalorder %s23, 0
      %p50 = por %p48, %p49
      %s52 = sadd.s32 %s51, 1
      %p55 = scmp.eq.s32.totalorder %s17, 1
      %p56 = scmp.ne.s32.totalorder %s51, %s53
      %p57 = scmp.eq.s32.totalorder %s17, 0
      %p58 = por %p56, %p57
      %p59 = scmp.ne.s32.totalorder %s51, %s53
      %p60 = scmp.eq.s32.totalorder %s22, 1
      %p61 = por %p59, %p60
      %p62 = scmp.ne.s32.totalorder %s53, %s54
      %p63 = scmp.eq.s32.totalorder %s22, 0
      %p64 = por %p62, %p63
      %p65 = scmp.ne.s32.totalorder %s53, %s54
      %p66 = scmp.eq.s32.totalorder %s23, 1
      %p67 = por %p65, %p66
      %p69 = scmp.ne.s32.totalorder %s54, %s68
      %p70 = scmp.eq.s32.totalorder %s23, 0
      %p71 = por %p69, %p70
      %s73 = sadd.s32 %s72, 1
      %p76 = scmp.eq.s32.totalorder %s17, 1
      %p77 = scmp.ne.s32.totalorder %s72, %s74
      %p78 = scmp.eq.s32.totalorder %s17, 0
      %p79 = por %p77, %p78
      %p80 = scmp.ne.s32.totalorder %s72, %s74
      %p81 = scmp.eq.s32.totalorder %s22, 1
      %p82 = por %p80, %p81
      %p83 = scmp.ne.s32.totalorder %s74, %s75
      %p84 = scmp.eq.s32.totalorder %s22, 0
      %p85 = por %p83, %p84
      %p86 = scmp.ne.s32.totalorder %s74, %s75
      %p87 = scmp.eq.s32.totalorder %s23, 1
      %p88 = por %p86, %p87
      %p90 = scmp.ne.s32.totalorder %s75, %s89
      %p91 = scmp.eq.s32.totalorder %s23, 0
      %p92 = por %p90, %p91
      %s94 = sadd.s32 %s93, 1
      %p97 = scmp.eq.s32.totalorder %s17, 1
      %p98 = scmp.ne.s32.totalorder %s93, %s95
      %p99 = scmp.eq.s32.totalorder %s17, 0
      %p100 = por %p98, %p99
      %p101 = scmp.ne.s32.totalorder %s93, %s95
      %p102 = scmp.eq.s32.totalorder %s22, 1
      %p103 = por %p101, %p102
      %p104 = scmp.ne.s32.totalorder %s95, %s96
      %p105 = scmp.eq.s32.totalorder %s22, 0
      %p106 = por %p104, %p105
      %p107 = scmp.ne.s32.totalorder %s95, %s96
      %p108 = scmp.eq.s32.totalorder %s23, 1
      %p109 = por %p107, %p108
      %p111 = scmp.ne.s32.totalorder %s96, %s110
      %p112 = scmp.eq.s32.totalorder %s23, 0
      %p113 = por %p111, %p112
      %s114 = ssub.s32 %s17, %s24
      %p115 = scmp.eq.s32.totalorder %s114, 0
      %s117 = sadd.s32 %s116, 1
      %s118 = scalar_select %p115, %s116, %s117
      %p121 = pneg %p115
      %p122 = scmp.eq.s32.totalorder %s17, 1
      %p123 = por %p121, %p122
      %p124 = scmp.ne.s32.totalorder %s116, %s119
      %p125 = scmp.eq.s32.totalorder %s17, 0
      %p126 = por %p124, %p125
      %p127 = scmp.ne.s32.totalorder %s116, %s119
      %p128 = scmp.eq.s32.totalorder %s22, 1
      %p129 = por %p127, %p128
      %p130 = scmp.ne.s32.totalorder %s119, %s120
      %p131 = scmp.eq.s32.totalorder %s22, 0
      %p132 = por %p130, %p131
      %p133 = scmp.ne.s32.totalorder %s119, %s120
      %p134 = scmp.eq.s32.totalorder %s23, 1
      %p135 = por %p133, %p134
      %p137 = scmp.ne.s32.totalorder %s120, %s136
      %p138 = scmp.eq.s32.totalorder %s23, 0
      %p139 = por %p137, %p138
      %p140 = scmp.le.s32.totalorder 1, %s17
      %p141 = scmp.lt.s32.totalorder %s17, 3
      %p142 = pnand %p140, %p141
      %p143 = pneg %p142
      // Predicated region
      $region9: #{tpu_custom_call.1} parent=5 // pred_check
        _
      $region10: #{tpu_custom_call.1} parent=5 // pred_check_branch
        %145 = sbr.rel (%p142) target = $region12
      $region11: #{tpu_custom_call.1} parent=5 // pred_region
        %s146 = ssub.s32 %s17, 1
        // Predicated region
        $region13: #{tpu_custom_call.1} parent=11 // pred_check
          %p147 = pneg %p64
        $region14: #{tpu_custom_call.1} parent=11 // pred_check_branch
          %149 = sbr.rel (%p147) target = $region16
        $region15: #{tpu_custom_call.1} parent=11 // pred_region
          _
        $region16: #{tpu_custom_call.1} parent=11 // pred_fallthru
          _
        // Predicated region
        $region17: #{tpu_custom_call.1} parent=11 // pred_check
          %p150 = pneg %p85
        $region18: #{tpu_custom_call.1} parent=11 // pred_check_branch
          %152 = sbr.rel (%p150) target = $region20
        $region19: #{tpu_custom_call.1} parent=11 // pred_region
          _
        $region20: #{tpu_custom_call.1} parent=11 // pred_fallthru
          _
        // Predicated region
        $region21: #{tpu_custom_call.1} parent=11 // pred_check
          %p153 = pneg %p106
        $region22: #{tpu_custom_call.1} parent=11 // pred_check_branch
          %155 = sbr.rel (%p153) target = $region24
        $region23: #{tpu_custom_call.1} parent=11 // pred_region
          %s157 = ssub.s32 2304, 2304
          %158 = vsyncadd [#allocation6], %s157
          %s159 = sshll.u32 [#allocation5], 4
          %s160 = int_to_ptr.vmem [resolvable:$true] %s159
          %165 = dma.hbm_to_vmem [thread:$0]  %s3, 2304, %s160, [#allocation6], 256, 256, 16
        $region24: #{tpu_custom_call.1} parent=11 // pred_fallthru
          _
      $region12: #{tpu_custom_call.1} parent=5 // pred_fallthru
        _
      %p166 = scmp.lt.s32.totalorder %s17, 2
      // Predicated region
      $region25: #{tpu_custom_call.1} parent=5 // pred_check
        %p167 = pneg %p166
      $region26: #{tpu_custom_call.1} parent=5 // pred_check_branch
        %169 = sbr.rel (%p167) target = $region28
      $region27: #{tpu_custom_call.1} parent=5 // pred_region
        // Predicated region
        $region29: #{tpu_custom_call.1} parent=27 // pred_check
          %p170 = pneg %p37
        $region30: #{tpu_custom_call.1} parent=27 // pred_check_branch
          %172 = sbr.rel (%p170) target = $region32
        $region31: #{tpu_custom_call.1} parent=27 // pred_region
          %s173 = sand.u32 %s27, 1
          %s174 = scalar_lea.sflag [#allocation3], %s173
          %s175 = sand.u32 %s27, 1
          %s176 = smul.addr %s175, 16
          %s177 = scalar_lea.vmem [#allocation2], %s176
          %s179 = ssub.s32 256, 256
          %180 = vsyncadd %s174, %s179
          %s181 = smul.addr %s17, 2
          %s182 = smul.addr %s181, 128
          %s183 = scalar_lea.hbm %s0, %s182
          %s185 = sshll.u32 %s177, 4
          %s186 = int_to_ptr.vmem [resolvable:$true] %s185
          %188 = dma.hbm_to_vmem [thread:$0]  %s183, 256, %s186, %s174
        $region32: #{tpu_custom_call.1} parent=27 // pred_fallthru
          _
      $region28: #{tpu_custom_call.1} parent=5 // pred_fallthru
        _
      %p189 = scmp.le.s32.totalorder 1, %s17
      %p190 = scmp.lt.s32.totalorder %s17, 3
      %p191 = pnand %p189, %p190
      %p192 = pneg %p191
      // Predicated region
      $region33: #{tpu_custom_call.1} parent=5 // pred_check
        _
      $region34: #{tpu_custom_call.1} parent=5 // pred_check_branch
        %194 = sbr.rel (%p191) target = $region36
      $region35: #{tpu_custom_call.1} parent=5 // pred_region
        %s195 = ssub.s32 %s17, 1
        %s196 = sand.u32 %s30, 1
        %s197 = scalar_lea.sflag [#allocation3], %s196
        %s198 = sand.u32 %s30, 1
        %s199 = smul.addr %s198, 16
        %s200 = scalar_lea.vmem [#allocation2], %s199
        // Predicated region
        $region37: #{tpu_custom_call.1} parent=35 // pred_check
          %p201 = pneg %p43
        $region38: #{tpu_custom_call.1} parent=35 // pred_check_branch
          %203 = sbr.rel (%p201) target = $region40
        $region39: #{tpu_custom_call.1} parent=35 // pred_region
          %204 = dma.done %s197, 256
        $region40: #{tpu_custom_call.1} parent=35 // pred_fallthru
          _
        // Predicated region
        $region41: #{tpu_custom_call.1} parent=35 // pred_check
          %p205 = pneg %p106
        $region42: #{tpu_custom_call.1} parent=35 // pred_check_branch
          %207 = sbr.rel (%p205) target = $region44
        $region43: #{tpu_custom_call.1} parent=35 // pred_region
          %208 = dma.done [#allocation6], 2304
        $region44: #{tpu_custom_call.1} parent=35 // pred_fallthru
          _
        %s209 = sand.u32 %s30, 1
        %s210 = scalar_lea.sflag [#allocation3], %s209
        %s211 = sand.u32 %s30, 1
        %s212 = smul.addr %s211, 16
        %s213 = scalar_lea.vmem [#allocation2], %s212
        %p214 = pneg %p43
        %p215 = pneg %p40
        %p216 = pneg %p64
        %p217 = pneg %p61
        %p218 = pneg %p85
        %p219 = pneg %p82
        %p220 = pneg %p106
        %p221 = pneg %p103
        %p222 = pneg %p132
        %p223 = pneg %p129
        %s224 = sand.u32 %s119, 1
        %s225 = scalar_lea.sflag [#allocation4], %s224
        %s226 = sand.u32 %s119, 1
        %s227 = smul.addr %s226, 16
        %s228 = scalar_lea.vmem [#allocation7], %s227
        %v229 = vld [vmem:[%s1] sm:$0xff]
        %v230 = vld [vmem:[%s2] sm:$0xff]
        %v231 = vld [vmem:[#allocation5] sm:$0xff]
        %v232 = vld [vmem:[#allocation5 + $0x8] sm:$0xff]
        %v233 = vld [vmem:[#allocation5 + $0x10] sm:$0xff]
        %v234 = vld [vmem:[#allocation5 + $0x18] sm:$0xff]
        %v235 = vld [vmem:[#allocation5 + $0x20] sm:$0xff]
        %v236 = vld [vmem:[#allocation5 + $0x28] sm:$0xff]
        %v237 = vld [vmem:[#allocation5 + $0x30] sm:$0xff]
        %v238 = vld [vmem:[#allocation5 + $0x38] sm:$0xff]
        %v239 = vld [vmem:[#allocation5 + $0x40] sm:$0xff]
        %v240 = vld [vmem:[#allocation5 + $0x48] sm:$0xff]
        %v241 = vld [vmem:[#allocation5 + $0x50] sm:$0xff]
        %v242 = vld [vmem:[#allocation5 + $0x58] sm:$0xff]
        %v243 = vld [vmem:[#allocation5 + $0x60] sm:$0xff]
        %v244 = vld [vmem:[#allocation5 + $0x68] sm:$0xff]
        %v245 = vld [vmem:[#allocation5 + $0x70] sm:$0xff]
        %v246 = vld [vmem:[#allocation5 + $0x78] sm:$0xff]
        %v247 = vld [vmem:[#allocation5 + $0x80] sm:$0xff]
        %v248 = vld [vmem:[#allocation5 + $0x88] sm:$0xff]
        %v249 = vld [vmem:[%s200] sm:$0xff]
        %v250 = vld [vmem:[%s200 + $0x8] sm:$0xff]
        %251 = vrot.lane.b32.xlu0 %v249, 17
        %v252 = vpop.permute.xlu0 %251
        %253 = vrot.lane.b32.xlu0 %v250, 17
        %v254 = vpop.permute.xlu0 %253
        %v255 = vlaneseq
        %v256 = vand.u32 %v255, 127
        %vm257 = vcmp.lt.s32.totalorder %v256, 17
        %v258 = vsel %vm257, %v252, %v254
        %v259 = vsel %vm257, %v254, %v252
        %260 = vrot.lane.b32.xlu0 %v249, 16
        %v261 = vpop.permute.xlu0 %260
        %262 = vrot.lane.b32.xlu0 %v250, 16
        %v263 = vpop.permute.xlu0 %262
        %vm264 = vcmp.lt.s32.totalorder %v256, 16
        %v265 = vsel %vm264, %v261, %v263
        %v266 = vsel %vm264, %v263, %v261
        %267 = vrot.lane.b32.xlu0 %v249, 15
        %v268 = vpop.permute.xlu0 %267
        %269 = vrot.lane.b32.xlu0 %v250, 15
        %v270 = vpop.permute.xlu0 %269
        %vm271 = vcmp.lt.s32.totalorder %v256, 15
        %v272 = vsel %vm271, %v268, %v270
        %v273 = vsel %vm271, %v270, %v268
        %274 = vrot.lane.b32.xlu0 %v249, 1
        %v275 = vpop.permute.xlu0 %274
        %276 = vrot.lane.b32.xlu0 %v250, 1
        %v277 = vpop.permute.xlu0 %276
        %vm278 = vcmp.lt.s32.totalorder %v256, 1
        %v279 = vsel %vm278, %v275, %v277
        %v280 = vsel %vm278, %v277, %v275
        %281 = vrot.lane.b32.xlu0 %v249, 127
        %v282 = vpop.permute.xlu0 %281
        %283 = vrot.lane.b32.xlu0 %v250, 127
        %v284 = vpop.permute.xlu0 %283
        %vm285 = vcmp.lt.s32.totalorder %v256, 127
        %v286 = vsel %vm285, %v282, %v284
        %v287 = vsel %vm285, %v284, %v282
        %288 = vrot.lane.b32.xlu0 %v249, 113
        %v289 = vpop.permute.xlu0 %288
        %290 = vrot.lane.b32.xlu0 %v250, 113
        %v291 = vpop.permute.xlu0 %290
        %vm292 = vcmp.lt.s32.totalorder %v256, 113
        %v293 = vsel %vm292, %v289, %v291
        %v294 = vsel %vm292, %v291, %v289
        %295 = vrot.lane.b32.xlu0 %v249, 112
        %v296 = vpop.permute.xlu0 %295
        %297 = vrot.lane.b32.xlu0 %v250, 112
        %v298 = vpop.permute.xlu0 %297
        %vm299 = vcmp.lt.s32.totalorder %v256, 112
        %v300 = vsel %vm299, %v296, %v298
        %v301 = vsel %vm299, %v298, %v296
        %302 = vrot.lane.b32.xlu0 %v249, 111
        %v303 = vpop.permute.xlu0 %302
        %304 = vrot.lane.b32.xlu0 %v250, 111
        %v305 = vpop.permute.xlu0 %304
        %vm306 = vcmp.lt.s32.totalorder %v256, 111
        %v307 = vsel %vm306, %v303, %v305
        %v308 = vsel %vm306, %v305, %v303
        %v309 = vmul.f32 %v259, %v231
        %v310 = vmul.f32 %v258, %v232
        %v311 = vmul.f32 %v266, %v233
        %v312 = vmul.f32 %v265, %v234
        %v313 = vmul.f32 %v273, %v235
        %v314 = vmul.f32 %v272, %v236
        %v315 = vmul.f32 %v280, %v237
        %v316 = vmul.f32 %v279, %v238
        %v317 = vmul.f32 %v249, %v239
        %v318 = vmul.f32 %v250, %v240
        %v319 = vmul.f32 %v286, %v241
        %v320 = vmul.f32 %v287, %v242
        %v321 = vmul.f32 %v293, %v243
        %v322 = vmul.f32 %v294, %v244
        %v323 = vmul.f32 %v300, %v245
        %v324 = vmul.f32 %v301, %v246
        %v325 = vmul.f32 %v307, %v247
        %v326 = vmul.f32 %v308, %v248
        %328 = vset.pattern.permute.xlu0 0
        %329 = vperm.xlu0 %328, %v230
        %v330 = vpop.permute.xlu0 %329
        %vm332 = vcmask 588800
        %v334 = vsel %vm332, %v229, 0
        %336 = vmatprep.subr.mxu0 0.0
        %337 = vmatpush1.msra.mxu0 0.0
        %338 = vmatprep.subr.mxu0 0.0
        %339 = vmatpush1.msra.mxu0 0.0
        %340 = vmatprep.subr.mxu0 0.0
        %341 = vmatpush1.msra.mxu0 0.0
        %342 = vmatprep.subr.mxu0 0.0
        %343 = vmatpush1.msra.mxu0 0.0
        %344 = vmatprep.subr.mxu0 0.0
        %345 = vmatpush1.msra.mxu0 0.0
        %346 = vmatprep.subr.mxu0 0.0
        %347 = vmatpush1.msra.mxu0 0.0
        %348 = vmatprep.subr.mxu0 0.0
        %349 = vmatpush1.msra.mxu0 0.0
        %350 = vmatprep.subr.mxu0 %v326
        %351 = vmatpush1.msra.mxu0 %v325
        %352 = vmatprep.subr.mxu0 %v324
        %353 = vmatpush1.msra.mxu0 %v323
        %354 = vmatprep.subr.mxu0 %v322
        %355 = vmatpush1.msra.mxu0 %v321
        %356 = vmatprep.subr.mxu0 %v320
        %357 = vmatpush1.msra.mxu0 %v319
        %358 = vmatprep.subr.mxu0 %v318
        %359 = vmatpush1.msra.mxu0 %v317
        %360 = vmatprep.subr.mxu0 %v316
        %361 = vmatpush1.msra.mxu0 %v315
        %362 = vmatprep.subr.mxu0 %v314
        %363 = vmatpush1.msra.mxu0 %v313
        %364 = vmatprep.subr.mxu0 %v312
        %365 = vmatpush1.msra.mxu0 %v311
        %366 = vmatprep.subr.mxu0 %v310
        %367 = vmatpush1.msra.mxu0 %v309
        %368 = vmatprep.subr.mxu0 0.0
        %369 = vmatpush2.msra.mxu0 0.0
        %370 = vmatprep.subr.mxu0 0.0
        %371 = vmatpush2.msra.mxu0 0.0
        %372 = vmatprep.subr.mxu0 0.0
        %373 = vmatpush2.msra.mxu0 0.0
        %374 = vmatprep.subr.mxu0 0.0
        %375 = vmatpush2.msra.mxu0 0.0
        %376 = vmatprep.subr.mxu0 0.0
        %377 = vmatpush2.msra.mxu0 0.0
        %378 = vmatprep.subr.mxu0 0.0
        %379 = vmatpush2.msra.mxu0 0.0
        %380 = vmatprep.subr.mxu0 0.0
        %381 = vmatpush2.msra.mxu0 0.0
        %382 = vmatprep.subr.mxu0 0.0
        %383 = vmatpush2.msra.mxu0 0.0
        %384 = vmatprep.subr.mxu0 0.0
        %385 = vmatpush2.msra.mxu0 0.0
        %386 = vmatprep.subr.mxu0 0.0
        %387 = vmatpush2.msra.mxu0 0.0
        %388 = vmatprep.subr.mxu0 0.0
        %389 = vmatpush2.msra.mxu0 0.0
        %390 = vmatprep.subr.mxu0 0.0
        %391 = vmatpush2.msra.mxu0 0.0
        %392 = vmatprep.subr.mxu0 0.0
        %393 = vmatpush2.msra.mxu0 0.0
        %394 = vmatprep.subr.mxu0 0.0
        %395 = vmatpush2.msra.mxu0 0.0
        %396 = vmatprep.subr.mxu0 0.0
        %397 = vmatpush2.msra.mxu0 0.0
        %398 = vmatprep.subr.mxu0 0.0
        %399 = vmatpush2.msra.mxu0 0.0
        %400 = vmatprep.mubr.f32.mxu0 0.0
        %401 = vmatmul.mubr.f32.gmra.mxu0 %v334
        %v402 = vpop.f32.mrf.mxu0
        %v403 = vadd.f32 %v330, %v402
        %v404 = vpop.f32.mrf.mxu0
        %v405 = vadd.f32 %v330, %v404
        %406 = vdwg.mxu0
        %v407 = vadd.f32 %v249, %v403
        %v408 = vadd.f32 %v250, %v405
        %409 = vrot.lane.b32.xlu0 %v407, 17
        %v410 = vpop.permute.xlu0 %409
        %411 = vrot.lane.b32.xlu0 %v408, 17
        %v412 = vpop.permute.xlu0 %411
        %v413 = vsel %vm257, %v410, %v412
        %v414 = vsel %vm257, %v412, %v410
        %415 = vrot.lane.b32.xlu0 %v407, 16
        %v416 = vpop.permute.xlu0 %415
        %417 = vrot.lane.b32.xlu0 %v408, 16
        %v418 = vpop.permute.xlu0 %417
        %v419 = vsel %vm264, %v416, %v418
        %v420 = vsel %vm264, %v418, %v416
        %421 = vrot.lane.b32.xlu0 %v407, 15
        %v422 = vpop.permute.xlu0 %421
        %423 = vrot.lane.b32.xlu0 %v408, 15
        %v424 = vpop.permute.xlu0 %423
        %v425 = vsel %vm271, %v422, %v424
        %v426 = vsel %vm271, %v424, %v422
        %427 = vrot.lane.b32.xlu0 %v407, 1
        %v428 = vpop.permute.xlu0 %427
        %429 = vrot.lane.b32.xlu0 %v408, 1
        %v430 = vpop.permute.xlu0 %429
        %v431 = vsel %vm278, %v428, %v430
        %v432 = vsel %vm278, %v430, %v428
        %433 = vrot.lane.b32.xlu0 %v407, 127
        %v434 = vpop.permute.xlu0 %433
        %435 = vrot.lane.b32.xlu0 %v408, 127
        %v436 = vpop.permute.xlu0 %435
        %v437 = vsel %vm285, %v434, %v436
        %v438 = vsel %vm285, %v436, %v434
        %439 = vrot.lane.b32.xlu0 %v407, 113
        %v440 = vpop.permute.xlu0 %439
        %441 = vrot.lane.b32.xlu0 %v408, 113
        %v442 = vpop.permute.xlu0 %441
        %v443 = vsel %vm292, %v440, %v442
        %v444 = vsel %vm292, %v442, %v440
        %445 = vrot.lane.b32.xlu0 %v407, 112
        %v446 = vpop.permute.xlu0 %445
        %447 = vrot.lane.b32.xlu0 %v408, 112
        %v448 = vpop.permute.xlu0 %447
        %v449 = vsel %vm299, %v446, %v448
        %v450 = vsel %vm299, %v448, %v446
        %451 = vrot.lane.b32.xlu0 %v407, 111
        %v452 = vpop.permute.xlu0 %451
        %453 = vrot.lane.b32.xlu0 %v408, 111
        %v454 = vpop.permute.xlu0 %453
        %v455 = vsel %vm306, %v452, %v454
        %v456 = vsel %vm306, %v454, %v452
        %v457 = vmul.f32 %v414, %v231
        %v458 = vmul.f32 %v413, %v232
        %v459 = vmul.f32 %v420, %v233
        %v460 = vmul.f32 %v419, %v234
        %v461 = vmul.f32 %v426, %v235
        %v462 = vmul.f32 %v425, %v236
        %v463 = vmul.f32 %v432, %v237
        %v464 = vmul.f32 %v431, %v238
        %v465 = vmul.f32 %v407, %v239
        %v466 = vmul.f32 %v408, %v240
        %v467 = vmul.f32 %v437, %v241
        %v468 = vmul.f32 %v438, %v242
        %v469 = vmul.f32 %v443, %v243
        %v470 = vmul.f32 %v444, %v244
        %v471 = vmul.f32 %v449, %v245
        %v472 = vmul.f32 %v450, %v246
        %v473 = vmul.f32 %v455, %v247
        %v474 = vmul.f32 %v456, %v248
        %475 = vmatprep.subr.mxu0 0.0
        %476 = vmatpush1.msra.mxu0 0.0
        %477 = vmatprep.subr.mxu0 0.0
        %478 = vmatpush1.msra.mxu0 0.0
        %479 = vmatprep.subr.mxu0 0.0
        %480 = vmatpush1.msra.mxu0 0.0
        %481 = vmatprep.subr.mxu0 0.0
        %482 = vmatpush1.msra.mxu0 0.0
        %483 = vmatprep.subr.mxu0 0.0
        %484 = vmatpush1.msra.mxu0 0.0
        %485 = vmatprep.subr.mxu0 0.0
        %486 = vmatpush1.msra.mxu0 0.0
        %487 = vmatprep.subr.mxu0 0.0
        %488 = vmatpush1.msra.mxu0 0.0
        %489 = vmatprep.subr.mxu0 %v474
        %490 = vmatpush1.msra.mxu0 %v473
        %491 = vmatprep.subr.mxu0 %v472
        %492 = vmatpush1.msra.mxu0 %v471
        %493 = vmatprep.subr.mxu0 %v470
        %494 = vmatpush1.msra.mxu0 %v469
        %495 = vmatprep.subr.mxu0 %v468
        %496 = vmatpush1.msra.mxu0 %v467
        %497 = vmatprep.subr.mxu0 %v466
        %498 = vmatpush1.msra.mxu0 %v465
        %499 = vmatprep.subr.mxu0 %v464
        %500 = vmatpush1.msra.mxu0 %v463
        %501 = vmatprep.subr.mxu0 %v462
        %502 = vmatpush1.msra.mxu0 %v461
        %503 = vmatprep.subr.mxu0 %v460
        %504 = vmatpush1.msra.mxu0 %v459
        %505 = vmatprep.subr.mxu0 %v458
        %506 = vmatpush1.msra.mxu0 %v457
        %507 = vmatprep.subr.mxu0 0.0
        %508 = vmatpush2.msra.mxu0 0.0
        %509 = vmatprep.subr.mxu0 0.0
        %510 = vmatpush2.msra.mxu0 0.0
        %511 = vmatprep.subr.mxu0 0.0
        %512 = vmatpush2.msra.mxu0 0.0
        %513 = vmatprep.subr.mxu0 0.0
        %514 = vmatpush2.msra.mxu0 0.0
        %515 = vmatprep.subr.mxu0 0.0
        %516 = vmatpush2.msra.mxu0 0.0
        %517 = vmatprep.subr.mxu0 0.0
        %518 = vmatpush2.msra.mxu0 0.0
        %519 = vmatprep.subr.mxu0 0.0
        %520 = vmatpush2.msra.mxu0 0.0
        %521 = vmatprep.subr.mxu0 0.0
        %522 = vmatpush2.msra.mxu0 0.0
        %523 = vmatprep.subr.mxu0 0.0
        %524 = vmatpush2.msra.mxu0 0.0
        %525 = vmatprep.subr.mxu0 0.0
        %526 = vmatpush2.msra.mxu0 0.0
        %527 = vmatprep.subr.mxu0 0.0
        %528 = vmatpush2.msra.mxu0 0.0
        %529 = vmatprep.subr.mxu0 0.0
        %530 = vmatpush2.msra.mxu0 0.0
        %531 = vmatprep.subr.mxu0 0.0
        %532 = vmatpush2.msra.mxu0 0.0
        %533 = vmatprep.subr.mxu0 0.0
        %534 = vmatpush2.msra.mxu0 0.0
        %535 = vmatprep.subr.mxu0 0.0
        %536 = vmatpush2.msra.mxu0 0.0
        %537 = vmatprep.subr.mxu0 0.0
        %538 = vmatpush2.msra.mxu0 0.0
        %539 = vmatprep.mubr.f32.mxu0 0.0
        %540 = vmatmul.mubr.f32.gmra.mxu0 %v334
        %v541 = vpop.f32.mrf.mxu0
        %v542 = vadd.f32 %v330, %v541
        %v543 = vpop.f32.mrf.mxu0
        %v544 = vadd.f32 %v330, %v543
        %545 = vdwg.mxu0
        %v546 = vadd.f32 %v407, %v542
        %v547 = vadd.f32 %v408, %v544
        %548 = vrot.lane.b32.xlu0 %v546, 17
        %v549 = vpop.permute.xlu0 %548
        %550 = vrot.lane.b32.xlu0 %v547, 17
        %v551 = vpop.permute.xlu0 %550
        %v552 = vsel %vm257, %v549, %v551
        %v553 = vsel %vm257, %v551, %v549
        %554 = vrot.lane.b32.xlu0 %v546, 16
        %v555 = vpop.permute.xlu0 %554
        %556 = vrot.lane.b32.xlu0 %v547, 16
        %v557 = vpop.permute.xlu0 %556
        %v558 = vsel %vm264, %v555, %v557
        %v559 = vsel %vm264, %v557, %v555
        %560 = vrot.lane.b32.xlu0 %v546, 15
        %v561 = vpop.permute.xlu0 %560
        %562 = vrot.lane.b32.xlu0 %v547, 15
        %v563 = vpop.permute.xlu0 %562
        %v564 = vsel %vm271, %v561, %v563
        %v565 = vsel %vm271, %v563, %v561
        %566 = vrot.lane.b32.xlu0 %v546, 1
        %v567 = vpop.permute.xlu0 %566
        %568 = vrot.lane.b32.xlu0 %v547, 1
        %v569 = vpop.permute.xlu0 %568
        %v570 = vsel %vm278, %v567, %v569
        %v571 = vsel %vm278, %v569, %v567
        %572 = vrot.lane.b32.xlu0 %v546, 127
        %v573 = vpop.permute.xlu0 %572
        %574 = vrot.lane.b32.xlu0 %v547, 127
        %v575 = vpop.permute.xlu0 %574
        %v576 = vsel %vm285, %v573, %v575
        %v577 = vsel %vm285, %v575, %v573
        %578 = vrot.lane.b32.xlu0 %v546, 113
        %v579 = vpop.permute.xlu0 %578
        %580 = vrot.lane.b32.xlu0 %v547, 113
        %v581 = vpop.permute.xlu0 %580
        %v582 = vsel %vm292, %v579, %v581
        %v583 = vsel %vm292, %v581, %v579
        %584 = vrot.lane.b32.xlu0 %v546, 112
        %v585 = vpop.permute.xlu0 %584
        %586 = vrot.lane.b32.xlu0 %v547, 112
        %v587 = vpop.permute.xlu0 %586
        %v588 = vsel %vm299, %v585, %v587
        %v589 = vsel %vm299, %v587, %v585
        %590 = vrot.lane.b32.xlu0 %v546, 111
        %v591 = vpop.permute.xlu0 %590
        %592 = vrot.lane.b32.xlu0 %v547, 111
        %v593 = vpop.permute.xlu0 %592
        %v594 = vsel %vm306, %v591, %v593
        %v595 = vsel %vm306, %v593, %v591
        %v596 = vmul.f32 %v553, %v231
        %v597 = vmul.f32 %v552, %v232
        %v598 = vmul.f32 %v559, %v233
        %v599 = vmul.f32 %v558, %v234
        %v600 = vmul.f32 %v565, %v235
        %v601 = vmul.f32 %v564, %v236
        %v602 = vmul.f32 %v571, %v237
        %v603 = vmul.f32 %v570, %v238
        %v604 = vmul.f32 %v546, %v239
        %v605 = vmul.f32 %v547, %v240
        %v606 = vmul.f32 %v576, %v241
        %v607 = vmul.f32 %v577, %v242
        %v608 = vmul.f32 %v582, %v243
        %v609 = vmul.f32 %v583, %v244
        %v610 = vmul.f32 %v588, %v245
        %v611 = vmul.f32 %v589, %v246
        %v612 = vmul.f32 %v594, %v247
        %v613 = vmul.f32 %v595, %v248
        %614 = vmatprep.subr.mxu0 0.0
        %615 = vmatpush1.msra.mxu0 0.0
        %616 = vmatprep.subr.mxu0 0.0
        %617 = vmatpush1.msra.mxu0 0.0
        %618 = vmatprep.subr.mxu0 0.0
        %619 = vmatpush1.msra.mxu0 0.0
        %620 = vmatprep.subr.mxu0 0.0
        %621 = vmatpush1.msra.mxu0 0.0
        %622 = vmatprep.subr.mxu0 0.0
        %623 = vmatpush1.msra.mxu0 0.0
        %624 = vmatprep.subr.mxu0 0.0
        %625 = vmatpush1.msra.mxu0 0.0
        %626 = vmatprep.subr.mxu0 0.0
        %627 = vmatpush1.msra.mxu0 0.0
        %628 = vmatprep.subr.mxu0 %v613
        %629 = vmatpush1.msra.mxu0 %v612
        %630 = vmatprep.subr.mxu0 %v611
        %631 = vmatpush1.msra.mxu0 %v610
        %632 = vmatprep.subr.mxu0 %v609
        %633 = vmatpush1.msra.mxu0 %v608
        %634 = vmatprep.subr.mxu0 %v607
        %635 = vmatpush1.msra.mxu0 %v606
        %636 = vmatprep.subr.mxu0 %v605
        %637 = vmatpush1.msra.mxu0 %v604
        %638 = vmatprep.subr.mxu0 %v603
        %639 = vmatpush1.msra.mxu0 %v602
        %640 = vmatprep.subr.mxu0 %v601
        %641 = vmatpush1.msra.mxu0 %v600
        %642 = vmatprep.subr.mxu0 %v599
        %643 = vmatpush1.msra.mxu0 %v598
        %644 = vmatprep.subr.mxu0 %v597
        %645 = vmatpush1.msra.mxu0 %v596
        %646 = vmatprep.subr.mxu0 0.0
        %647 = vmatpush2.msra.mxu0 0.0
        %648 = vmatprep.subr.mxu0 0.0
        %649 = vmatpush2.msra.mxu0 0.0
        %650 = vmatprep.subr.mxu0 0.0
        %651 = vmatpush2.msra.mxu0 0.0
        %652 = vmatprep.subr.mxu0 0.0
        %653 = vmatpush2.msra.mxu0 0.0
        %654 = vmatprep.subr.mxu0 0.0
        %655 = vmatpush2.msra.mxu0 0.0
        %656 = vmatprep.subr.mxu0 0.0
        %657 = vmatpush2.msra.mxu0 0.0
        %658 = vmatprep.subr.mxu0 0.0
        %659 = vmatpush2.msra.mxu0 0.0
        %660 = vmatprep.subr.mxu0 0.0
        %661 = vmatpush2.msra.mxu0 0.0
        %662 = vmatprep.subr.mxu0 0.0
        %663 = vmatpush2.msra.mxu0 0.0
        %664 = vmatprep.subr.mxu0 0.0
        %665 = vmatpush2.msra.mxu0 0.0
        %666 = vmatprep.subr.mxu0 0.0
        %667 = vmatpush2.msra.mxu0 0.0
        %668 = vmatprep.subr.mxu0 0.0
        %669 = vmatpush2.msra.mxu0 0.0
        %670 = vmatprep.subr.mxu0 0.0
        %671 = vmatpush2.msra.mxu0 0.0
        %672 = vmatprep.subr.mxu0 0.0
        %673 = vmatpush2.msra.mxu0 0.0
        %674 = vmatprep.subr.mxu0 0.0
        %675 = vmatpush2.msra.mxu0 0.0
        %676 = vmatprep.subr.mxu0 0.0
        %677 = vmatpush2.msra.mxu0 0.0
        %678 = vmatprep.mubr.f32.mxu0 0.0
        %679 = vmatmul.mubr.f32.gmra.mxu0 %v334
        %v680 = vpop.f32.mrf.mxu0
        %v681 = vadd.f32 %v330, %v680
        %v682 = vpop.f32.mrf.mxu0
        %v683 = vadd.f32 %v330, %v682
        %684 = vdwg.mxu0
        %v685 = vadd.f32 %v546, %v681
        %v686 = vadd.f32 %v547, %v683
        %687 = vrot.lane.b32.xlu0 %v685, 17
        %v688 = vpop.permute.xlu0 %687
        %689 = vrot.lane.b32.xlu0 %v686, 17
        %v690 = vpop.permute.xlu0 %689
        %v691 = vsel %vm257, %v688, %v690
        %v692 = vsel %vm257, %v690, %v688
        %693 = vrot.lane.b32.xlu0 %v685, 16
        %v694 = vpop.permute.xlu0 %693
        %695 = vrot.lane.b32.xlu0 %v686, 16
        %v696 = vpop.permute.xlu0 %695
        %v697 = vsel %vm264, %v694, %v696
        %v698 = vsel %vm264, %v696, %v694
        %699 = vrot.lane.b32.xlu0 %v685, 15
        %v700 = vpop.permute.xlu0 %699
        %701 = vrot.lane.b32.xlu0 %v686, 15
        %v702 = vpop.permute.xlu0 %701
        %v703 = vsel %vm271, %v700, %v702
        %v704 = vsel %vm271, %v702, %v700
        %705 = vrot.lane.b32.xlu0 %v685, 1
        %v706 = vpop.permute.xlu0 %705
        %707 = vrot.lane.b32.xlu0 %v686, 1
        %v708 = vpop.permute.xlu0 %707
        %v709 = vsel %vm278, %v706, %v708
        %v710 = vsel %vm278, %v708, %v706
        %711 = vrot.lane.b32.xlu0 %v685, 127
        %v712 = vpop.permute.xlu0 %711
        %713 = vrot.lane.b32.xlu0 %v686, 127
        %v714 = vpop.permute.xlu0 %713
        %v715 = vsel %vm285, %v712, %v714
        %v716 = vsel %vm285, %v714, %v712
        %717 = vrot.lane.b32.xlu0 %v685, 113
        %v718 = vpop.permute.xlu0 %717
        %719 = vrot.lane.b32.xlu0 %v686, 113
        %v720 = vpop.permute.xlu0 %719
        %v721 = vsel %vm292, %v718, %v720
        %v722 = vsel %vm292, %v720, %v718
        %723 = vrot.lane.b32.xlu0 %v685, 112
        %v724 = vpop.permute.xlu0 %723
        %725 = vrot.lane.b32.xlu0 %v686, 112
        %v726 = vpop.permute.xlu0 %725
        %v727 = vsel %vm299, %v724, %v726
        %v728 = vsel %vm299, %v726, %v724
        %729 = vrot.lane.b32.xlu0 %v685, 111
        %v730 = vpop.permute.xlu0 %729
        %731 = vrot.lane.b32.xlu0 %v686, 111
        %v732 = vpop.permute.xlu0 %731
        %v733 = vsel %vm306, %v730, %v732
        %v734 = vsel %vm306, %v732, %v730
        %v735 = vmul.f32 %v692, %v231
        %v736 = vmul.f32 %v691, %v232
        %v737 = vmul.f32 %v698, %v233
        %v738 = vmul.f32 %v697, %v234
        %v739 = vmul.f32 %v704, %v235
        %v740 = vmul.f32 %v703, %v236
        %v741 = vmul.f32 %v710, %v237
        %v742 = vmul.f32 %v709, %v238
        %v743 = vmul.f32 %v685, %v239
        %v744 = vmul.f32 %v686, %v240
        %v745 = vmul.f32 %v715, %v241
        %v746 = vmul.f32 %v716, %v242
        %v747 = vmul.f32 %v721, %v243
        %v748 = vmul.f32 %v722, %v244
        %v749 = vmul.f32 %v727, %v245
        %v750 = vmul.f32 %v728, %v246
        %v751 = vmul.f32 %v733, %v247
        %v752 = vmul.f32 %v734, %v248
        %753 = vmatprep.subr.mxu0 0.0
        %754 = vmatpush1.msra.mxu0 0.0
        %755 = vmatprep.subr.mxu0 0.0
        %756 = vmatpush1.msra.mxu0 0.0
        %757 = vmatprep.subr.mxu0 0.0
        %758 = vmatpush1.msra.mxu0 0.0
        %759 = vmatprep.subr.mxu0 0.0
        %760 = vmatpush1.msra.mxu0 0.0
        %761 = vmatprep.subr.mxu0 0.0
        %762 = vmatpush1.msra.mxu0 0.0
        %763 = vmatprep.subr.mxu0 0.0
        %764 = vmatpush1.msra.mxu0 0.0
        %765 = vmatprep.subr.mxu0 0.0
        %766 = vmatpush1.msra.mxu0 0.0
        %767 = vmatprep.subr.mxu0 %v752
        %768 = vmatpush1.msra.mxu0 %v751
        %769 = vmatprep.subr.mxu0 %v750
        %770 = vmatpush1.msra.mxu0 %v749
        %771 = vmatprep.subr.mxu0 %v748
        %772 = vmatpush1.msra.mxu0 %v747
        %773 = vmatprep.subr.mxu0 %v746
        %774 = vmatpush1.msra.mxu0 %v745
        %775 = vmatprep.subr.mxu0 %v744
        %776 = vmatpush1.msra.mxu0 %v743
        %777 = vmatprep.subr.mxu0 %v742
        %778 = vmatpush1.msra.mxu0 %v741
        %779 = vmatprep.subr.mxu0 %v740
        %780 = vmatpush1.msra.mxu0 %v739
        %781 = vmatprep.subr.mxu0 %v738
        %782 = vmatpush1.msra.mxu0 %v737
        %783 = vmatprep.subr.mxu0 %v736
        %784 = vmatpush1.msra.mxu0 %v735
        %785 = vmatprep.subr.mxu0 0.0
        %786 = vmatpush2.msra.mxu0 0.0
        %787 = vmatprep.subr.mxu0 0.0
        %788 = vmatpush2.msra.mxu0 0.0
        %789 = vmatprep.subr.mxu0 0.0
        %790 = vmatpush2.msra.mxu0 0.0
        %791 = vmatprep.subr.mxu0 0.0
        %792 = vmatpush2.msra.mxu0 0.0
        %793 = vmatprep.subr.mxu0 0.0
        %794 = vmatpush2.msra.mxu0 0.0
        %795 = vmatprep.subr.mxu0 0.0
        %796 = vmatpush2.msra.mxu0 0.0
        %797 = vmatprep.subr.mxu0 0.0
        %798 = vmatpush2.msra.mxu0 0.0
        %799 = vmatprep.subr.mxu0 0.0
        %800 = vmatpush2.msra.mxu0 0.0
        %801 = vmatprep.subr.mxu0 0.0
        %802 = vmatpush2.msra.mxu0 0.0
        %803 = vmatprep.subr.mxu0 0.0
        %804 = vmatpush2.msra.mxu0 0.0
        %805 = vmatprep.subr.mxu0 0.0
        %806 = vmatpush2.msra.mxu0 0.0
        %807 = vmatprep.subr.mxu0 0.0
        %808 = vmatpush2.msra.mxu0 0.0
        %809 = vmatprep.subr.mxu0 0.0
        %810 = vmatpush2.msra.mxu0 0.0
        %811 = vmatprep.subr.mxu0 0.0
        %812 = vmatpush2.msra.mxu0 0.0
        %813 = vmatprep.subr.mxu0 0.0
        %814 = vmatpush2.msra.mxu0 0.0
        %815 = vmatprep.subr.mxu0 0.0
        %816 = vmatpush2.msra.mxu0 0.0
        %817 = vmatprep.mubr.f32.mxu0 0.0
        %818 = vmatmul.mubr.f32.gmra.mxu0 %v334
        %v819 = vpop.f32.mrf.mxu0
        %v820 = vadd.f32 %v330, %v819
        %v821 = vpop.f32.mrf.mxu0
        %v822 = vadd.f32 %v330, %v821
        %823 = vdwg.mxu0
        %v824 = vadd.f32 %v685, %v820
        %v825 = vadd.f32 %v686, %v822
        %826 = vst [vmem:[%s228] sm:$0xff] %v824
        %827 = vst [vmem:[%s228 + $0x8] sm:$0xff] %v825
        %s828 = sand.u32 %s119, 1
        %s829 = scalar_lea.sflag [#allocation4], %s828
        %s830 = sand.u32 %s119, 1
        %s831 = smul.addr %s830, 16
        %s832 = scalar_lea.vmem [#allocation7], %s831
        // Predicated region
        $region45: #{tpu_custom_call.1} parent=35 // pred_check
          %p833 = pneg %p129
        $region46: #{tpu_custom_call.1} parent=35 // pred_check_branch
          %835 = sbr.rel (%p833) target = $region48
        $region47: #{tpu_custom_call.1} parent=35 // pred_region
          %s837 = ssub.s32 256, 256
          %838 = vsyncadd %s829, %s837
          %s839 = smul.addr %s22, 2
          %s840 = smul.addr %s839, 128
          %s841 = scalar_lea.hbm %s4, %s840
          %s843 = sshll.u32 %s832, 4
          %s844 = int_to_ptr.vmem [resolvable:$true] %s843
          %846 = dma.vmem_to_hbm [thread:$0]  %s844, 256, %s841, %s829
        $region48: #{tpu_custom_call.1} parent=35 // pred_fallthru
          _
      $region36: #{tpu_custom_call.1} parent=5 // pred_fallthru
        _
      %p847 = scmp.le.s32.totalorder 2, %s17
      // Predicated region
      $region49: #{tpu_custom_call.1} parent=5 // pred_check
        %p848 = pneg %p847
      $region50: #{tpu_custom_call.1} parent=5 // pred_check_branch
        %850 = sbr.rel (%p848) target = $region52
      $region51: #{tpu_custom_call.1} parent=5 // pred_region
        %s851 = ssub.s32 %s17, 2
        // Predicated region
        $region53: #{tpu_custom_call.1} parent=51 // pred_check
          %p852 = pneg %p135
        $region54: #{tpu_custom_call.1} parent=51 // pred_check_branch
          %854 = sbr.rel (%p852) target = $region56
        $region55: #{tpu_custom_call.1} parent=51 // pred_region
          %s855 = sand.u32 %s120, 1
          %s856 = scalar_lea.sflag [#allocation4], %s855
          %s857 = sand.u32 %s120, 1
          %s858 = smul.addr %s857, 16
          %s859 = scalar_lea.vmem [#allocation7], %s858
          %860 = dma.done %s856, 256
        $region56: #{tpu_custom_call.1} parent=51 // pred_fallthru
          _
      $region52: #{tpu_custom_call.1} parent=5 // pred_fallthru
        _
    $region6: #{tpu_custom_call.1} parent=1 // loop_footer
      %s21 = sadd.s32 1, %s17
    $region7: #{tpu_custom_call.1} parent=1 // loop_footer_branch
      %16 = sbr.rel target = $region3
    $region8: #{tpu_custom_call.1} parent=1 // loop_exit
      _
    %861 = vsyncpa [#allocation3], 1
    %s862 = scalar_lea.sflag [#allocation3], 1
    %863 = vsyncpa %s862, 1
    %864 = vsyncpa [#allocation6], 1
    %865 = vsyncpa [#allocation4], 1
    %s866 = scalar_lea.sflag [#allocation4], 1
    %867 = vsyncpa %s866, 1

</llo_original>
